<compile_context>
chip_gen: v7x
topology: tpu7x:2x2x1
jax: 0.10.0
libtpu: 0.0.40
codegen_flags: <defaults>
</compile_context>

<pallas_src>
import functools

import jax
import jax.numpy as jnp
from jax import lax
from jax.experimental import pallas as pl
from jax.experimental.pallas import tpu as pltpu


# --------------------------------------------------------------------------- #
# Kernels
# --------------------------------------------------------------------------- #

def drs_kernel(x_ref, w_ref, o_ref, *, inv_hw):
    """Single-pass kernel. x_ref: (tb, C, HW); w_ref: (C, C) pre-transposed (in, out)."""
    x = jnp.maximum(x_ref[...], 0)                                  # ReLU (native dtype)
    x_max = jnp.max(x, axis=-1)                                     # (tb, C) global max pool
    # Global avg pool: accumulate in f32 inside the reduction (no full f32 copy).
    avg = jnp.sum(x, axis=-1, dtype=jnp.float32) * inv_hw           # (tb, C) f32
    # Linear(C, C, bias=False): avg @ W^T. The weight was pre-transposed on the
    # host, so we contract its dim 0 directly (no in-kernel transpose, no f32
    # weight copy); accumulation stays f32 via preferred_element_type.
    ctrl = lax.dot_general(avg.astype(w_ref.dtype), w_ref[...],
                           dimension_numbers=(((1,), (0,)), ((), ())),
                           preferred_element_type=jnp.float32)
    ctrl = jax.nn.sigmoid(ctrl)                                     # (tb, C) f32
    cap = (x_max.astype(jnp.float32) * ctrl).astype(x_ref.dtype)[..., None]
    # Recompute relu at the store (cheap VPU op) instead of keeping `x` live.
    o_ref[...] = jnp.minimum(jnp.maximum(x_ref[...], 0), cap).astype(o_ref.dtype)


def drs_reduce_kernel(x_ref, max_ref, sum_ref):
    """Two-pass path, pass 1: accumulate per-(b, c) max / sum over HW tiles."""
    @pl.when(pl.program_id(1) == 0)
    def _():
        max_ref[...] = jnp.zeros_like(max_ref)     # relu(x) >= 0 so 0 is the max identity
        sum_ref[...] = jnp.zeros_like(sum_ref)
    x = jnp.maximum(x_ref[...], 0)
    max_ref[...] = jnp.maximum(max_ref[...], jnp.max(x, axis=-1).astype(jnp.float32))
    sum_ref[...] = sum_ref[...] + jnp.sum(x, axis=-1, dtype=jnp.float32)


def drs_apply_kernel(x_ref, cap_ref, o_ref):
    """Two-pass path, pass 2: out = min(relu(x), cap) broadcast over spatial."""
    o_ref[...] = jnp.minimum(jnp.maximum(x_ref[...], 0),
                             cap_ref[...][..., None]).astype(o_ref.dtype)


# --------------------------------------------------------------------------- #
# Tiling / VMEM policy helpers
# --------------------------------------------------------------------------- #

def _round_up(v, m):
    return ((v + m - 1) // m) * m


def _sublane_mult(itemsize):
    return 8 if itemsize >= 4 else (16 if itemsize == 2 else 32)


def _vmem_policy():
    """Generation-aware VMEM budget / grid policy."""
    vmem_bytes = None
    try:
        info = pltpu.get_tpu_info()
        vmem_bytes = getattr(info, "vmem_capacity_bytes", None)
    except Exception:
        vmem_bytes = None
    if vmem_bytes is None:
        vmem_bytes = 64 * 1024 * 1024      # conservative default (v7x-sized)
    if vmem_bytes >= 100 * 1024 * 1024:
        # v5e / v6e: 128 MiB VMEM, single TensorCore -> big blocks, no need for >=2 steps.
        return dict(budget=96 << 20, limit=110 << 20, even_grid=False)
    # v7x: 64 MiB per TC, 2 TCs -> conservative budget, prefer even grid length.
    return dict(budget=40 << 20, limit=48 << 20, even_grid=True)


def _choose_batch_tile(b, per_sample_bytes, budget_bytes, prefer_even_grid):
    """Largest divisor of b fitting the budget; None if even tb=1 does not fit."""
    max_tb = budget_bytes // max(per_sample_bytes, 1)
    if max_tb < 1:
        return None
    divisors = [d for d in range(1, b + 1) if b % d == 0 and d <= max_tb]
    if not divisors:
        return None
    if prefer_even_grid:
        even = [d for d in divisors if (b // d) % 2 == 0]
        if even:
            return max(even)
    return max(divisors)


def _choose_hw_tile(c, itemsize, budget_bytes):
    """Largest HW tile (multiple of 128) whose tb=1 footprint fits the budget."""
    cp = _round_up(c, _sublane_mult(itemsize))
    per_128_lanes = cp * 128 * itemsize * 6
    k = max(1, budget_bytes // max(per_128_lanes, 1))
    # TODO(synk): if even a 128-lane tile does not fit (enormous C), also tile C.
    return int(k) * 128


# --------------------------------------------------------------------------- #
# pallas_call wrappers
# --------------------------------------------------------------------------- #

def _drs_single_pass(x_flat, w_t, hw, tb, policy):
    b, c, _ = x_flat.shape
    itemsize = x_flat.dtype.itemsize
    cost = pl.CostEstimate(
        flops=2 * b * c * c + 6 * b * c * hw,
        transcendentals=b * c,
        bytes_accessed=2 * b * c * hw * itemsize + c * c * w_t.dtype.itemsize,
    )

    def build(weight_single_buffer):
        if weight_single_buffer:
            # Constant block index -> one buffer is enough; saves VMEM for large C.
            w_spec = pl.BlockSpec((c, c), lambda i: (0, 0),
                                  pipeline_mode=pl.Buffered(1))
        else:
            w_spec = pl.BlockSpec((c, c), lambda i: (0, 0))
        return pl.pallas_call(
            functools.partial(drs_kernel, inv_hw=1.0 / float(hw)),
            out_shape=jax.ShapeDtypeStruct((b, c, hw), x_flat.dtype),
            grid_spec=pltpu.PrefetchScalarGridSpec(
                num_scalar_prefetch=0,
                grid=(b // tb,),
                in_specs=[pl.BlockSpec((tb, c, hw), lambda i: (i, 0, 0)), w_spec],
                out_specs=pl.BlockSpec((tb, c, hw), lambda i: (i, 0, 0)),
            ),
            compiler_params=pltpu.CompilerParams(
                dimension_semantics=("parallel",),
                vmem_limit_bytes=policy["limit"]),
            cost_estimate=cost,
        )

    try:
        return build(True)(x_flat, w_t)
    except Exception:
        # pl.Buffered(1) not accepted on this jax version -> default double buffer.
        return build(False)(x_flat, w_t)


def _drs_two_pass(x_flat, w_t, hw, thw, policy):
    """HW-tiled two-pass path for slabs that do not fit VMEM (or when forced)."""
    b, c, _ = x_flat.shape
    hw_pad = _round_up(hw, thw)
    if hw_pad != hw:
        # Zero padding is reduction-safe: relu(0)=0 is the identity of both the
        # max (over non-negatives) and the sum; padded outputs are sliced off.
        x_flat = jnp.pad(x_flat, ((0, 0), (0, 0), (0, hw_pad - hw)))
    n_hw = hw_pad // thw

    maxs, sums = pl.pallas_call(
        drs_reduce_kernel,
        out_shape=(jax.ShapeDtypeStruct((b, c), jnp.float32),
                   jax.ShapeDtypeStruct((b, c), jnp.float32)),
        grid_spec=pltpu.PrefetchScalarGridSpec(
            num_scalar_prefetch=0,
            grid=(b, n_hw),
            in_specs=[pl.BlockSpec((1, c, thw), lambda i, j: (i, 0, j))],
            out_specs=(pl.BlockSpec((1, c), lambda i, j: (i, 0)),
                       pl.BlockSpec((1, c), lambda i, j: (i, 0))),
        ),
        compiler_params=pltpu.CompilerParams(
            dimension_semantics=("parallel", "arbitrary"),
            vmem_limit_bytes=policy["limit"]),
    )(x_flat)

    # Tiny (B, C) controller math: negligible next to the streaming passes.
    ctrl = jax.nn.sigmoid((sums * (1.0 / float(hw))) @ w_t.astype(jnp.float32))
    cap = (maxs * ctrl).astype(x_flat.dtype)                          # (B, C)

    out = pl.pallas_call(
        drs_apply_kernel,
        out_shape=jax.ShapeDtypeStruct((b, c, hw_pad), x_flat.dtype),
        grid_spec=pltpu.PrefetchScalarGridSpec(
            num_scalar_prefetch=0,
            grid=(b, n_hw),
            in_specs=[pl.BlockSpec((1, c, thw), lambda i, j: (i, 0, j)),
                      pl.BlockSpec((1, c), lambda i, j: (i, 0))],
            out_specs=pl.BlockSpec((1, c, thw), lambda i, j: (i, 0, j)),
        ),
        compiler_params=pltpu.CompilerParams(
            dimension_semantics=("parallel", "parallel"),
            vmem_limit_bytes=policy["limit"]),
    )(x_flat, cap)
    return out[:, :, :hw]


def drs_learnable(x_nchw, fc_weight, *, force_two_pass=False):
    """x_nchw: (B, C, H, W); fc_weight: (C, C) nn.Linear weight (out, in)."""
    b, c, h, w = x_nchw.shape
    hw = h * w
    x_flat = x_nchw.reshape(b, c, hw)           # free (metadata only), no padding
    w_t = fc_weight.T                           # (in, out): kernel contracts dim 0

    policy = _vmem_policy()
    itemsize = x_flat.dtype.itemsize
    cp = _round_up(c, _sublane_mult(itemsize))
    hwp = _round_up(hw, 128)
    # Rough per-sample footprint: double-buffered in + out + ~2 block temps.
    per_sample = cp * hwp * itemsize * 6
    budget = policy["budget"] - 2 * c * c * fc_weight.dtype.itemsize

    tb = None
    if not force_two_pass:
        tb = _choose_batch_tile(b, per_sample, budget, policy["even_grid"])

    if tb is None:
        thw = 128 if force_two_pass else min(hwp, _choose_hw_tile(c, itemsize,
                                                                  policy["budget"]))
        out_flat = _drs_two_pass(x_flat, w_t, hw, thw, policy)
    else:
        out_flat = _drs_single_pass(x_flat, w_t, hw, tb, policy)

    return out_flat.reshape(b, c, h, w)


# --------------------------------------------------------------------------- #
# Pure-JAX reference mirroring the PyTorch forward
# --------------------------------------------------------------------------- #

def drs_reference(x, fc_weight):
    x = jnp.maximum(x, 0.0)
    x_max = jnp.max(x, axis=(2, 3), keepdims=True)
    avg = jnp.mean(x, axis=(2, 3))
    ctrl = jax.nn.sigmoid(avg @ fc_weight.T)[:, :, None, None]
    return jnp.minimum(x, x_max * ctrl)


if __name__ == "__main__":
    key = jax.random.PRNGKey(0)
    k1x, k1w, k2x, k2w, k3x, k3w = jax.random.split(key, 6)

    # Case 1: HW a multiple of 128, single-pass path.
    B, C, H, W = 2, 4, 16, 16
    x1 = jax.random.normal(k1x, (B, C, H, W), dtype=jnp.float32)
    bound = 1.0 / jnp.sqrt(C)
    w1 = jax.random.uniform(k1w, (C, C), minval=-bound, maxval=bound, dtype=jnp.float32)
    out1 = jax.block_until_ready(drs_learnable(x1, w1))
    assert out1.shape == (B, C, H, W)
    assert jnp.allclose(out1, drs_reference(x1, w1), atol=1e-5, rtol=1e-5)

    # Case 2: ragged spatial (7*7 = 49 lanes), single-pass, no host pad/depad.
    B2, C2, H2, W2 = 4, 8, 7, 7
    x2 = jax.random.normal(k2x, (B2, C2, H2, W2), dtype=jnp.float32)
    bound2 = 1.0 / jnp.sqrt(C2)
    w2 = jax.random.uniform(k2w, (C2, C2), minval=-bound2, maxval=bound2, dtype=jnp.float32)
    out2 = jax.block_until_ready(drs_learnable(x2, w2))
    assert out2.shape == (B2, C2, H2, W2)
    assert jnp.allclose(out2, drs_reference(x2, w2), atol=1e-5, rtol=1e-5)

    # Case 3: exercise the HW-tiled two-pass fallback (forced, small shape).
    B3, C3, H3, W3 = 2, 8, 20, 20
    x3 = jax.random.normal(k3x, (B3, C3, H3, W3), dtype=jnp.float32)
    bound3 = 1.0 / jnp.sqrt(C3)
    w3 = jax.random.uniform(k3w, (C3, C3), minval=-bound3, maxval=bound3, dtype=jnp.float32)
    out3 = jax.block_until_ready(drs_learnable(x3, w3, force_two_pass=True))
    assert out3.shape == (B3, C3, H3, W3)
    assert jnp.allclose(out3, drs_reference(x3, w3), atol=1e-5, rtol=1e-5)

    print("KERNEL_OK")
</pallas_src>

<mosaic_0001>
module attributes {stable_mosaic.version = 11 : i64} {
  func.func @drs_kernel(%arg0: i32, %arg1: memref<1x4x256xf32, #tpu.memory_space<vmem>>, %arg2: memref<4x4xf32, #tpu.memory_space<vmem>>, %arg3: memref<1x4x256xf32, #tpu.memory_space<vmem>>) attributes {dimension_semantics = [#tpu.dimension_semantics<parallel>], iteration_bounds = array<i64: 2>, scalar_prefetch = 0 : i64, scratch_operands = 0 : i64, tpu.core_type = #tpu.core_type<tc>, window_params = [{transform_indices = @transform_0, window_bounds = array<i64: 1, 4, 256>}, {pipeline_mode = #tpu.pipeline_mode<synchronous>, transform_indices = @transform_1, window_bounds = array<i64: 4, 4>}, {transform_indices = @transform_2, window_bounds = array<i64: 1, 4, 256>}]} {
    %c0 = arith.constant 0 : index
    %c0_0 = arith.constant 0 : index
    %c0_1 = arith.constant 0 : index
    %0 = vector.load %arg1[%c0, %c0_0, %c0_1] : memref<1x4x256xf32, #tpu.memory_space<vmem>>, vector<1x4x256xf32>
    %cst = arith.constant 0.000000e+00 : f32
    %1 = vector.broadcast %cst : f32 to vector<1x4x256xf32>
    %2 = arith.maximumf %0, %1 : vector<1x4x256xf32>
    %cst_2 = arith.constant dense<0xFF800000> : vector<1x4xf32>
    %3 = vector.multi_reduction <maximumf>, %2, %cst_2 [2] : vector<1x4x256xf32> to vector<1x4xf32>
    %cst_3 = arith.constant dense<0.000000e+00> : vector<1x4xf32>
    %4 = vector.multi_reduction <add>, %2, %cst_3 [2] : vector<1x4x256xf32> to vector<1x4xf32>
    %cst_4 = arith.constant 3.906250e-03 : f32
    %5 = vector.broadcast %cst_4 : f32 to vector<1x4xf32>
    %6 = arith.mulf %4, %5 : vector<1x4xf32>
    %c0_5 = arith.constant 0 : index
    %c0_6 = arith.constant 0 : index
    %7 = vector.load %arg2[%c0_5, %c0_6] : memref<4x4xf32, #tpu.memory_space<vmem>>, vector<4x4xf32>
    %cst_7 = arith.constant dense<0.000000e+00> : vector<1x4xf32>
    %8 = tpu.matmul %6, %7, %cst_7 {dimension_numbers = #tpu.dot_dimension_numbers<[1], [0], [0], [1], [0, 0, 1, 1], [], []>} : vector<1x4xf32>, vector<4x4xf32>, vector<1x4xf32> -> vector<1x4xf32>
    %9 = arith.negf %8 : vector<1x4xf32>
    %10 = math.exp %9 : vector<1x4xf32>
    %cst_8 = arith.constant 1.000000e+00 : f32
    %11 = vector.broadcast %cst_8 : f32 to vector<1x4xf32>
    %12 = arith.addf %11, %10 : vector<1x4xf32>
    %13 = arith.divf %11, %12 : vector<1x4xf32>
    %14 = arith.mulf %3, %13 : vector<1x4xf32>
    %15 = vector.shape_cast %14 : vector<1x4xf32> to vector<1x4x1xf32>
    %c0_9 = arith.constant 0 : index
    %c0_10 = arith.constant 0 : index
    %c0_11 = arith.constant 0 : index
    %16 = vector.load %arg1[%c0_9, %c0_10, %c0_11] : memref<1x4x256xf32, #tpu.memory_space<vmem>>, vector<1x4x256xf32>
    %cst_12 = arith.constant 0.000000e+00 : f32
    %17 = vector.broadcast %cst_12 : f32 to vector<1x4x256xf32>
    %18 = arith.maximumf %16, %17 : vector<1x4x256xf32>
    %19 = vector.broadcast %15 : vector<1x4x1xf32> to vector<1x4x256xf32>
    %20 = arith.minimumf %18, %19 : vector<1x4x256xf32>
    %c0_13 = arith.constant 0 : index
    %c0_14 = arith.constant 0 : index
    %c0_15 = arith.constant 0 : index
    %21 = vector.load %arg3[%c0_13, %c0_14, %c0_15] : memref<1x4x256xf32, #tpu.memory_space<vmem>>, vector<1x4x256xf32>
    tpu.vector_store %arg3[%c0_13, %c0_14, %c0_15], %20 {strides = array<i32>} : memref<1x4x256xf32, #tpu.memory_space<vmem>>, vector<1x4x256xf32>,
    return
  }
  func.func @transform_0(%arg0: i32) -> (i32, i32, i32) {
    %c0_i32 = arith.constant 0 : i32
    %c0_i32_0 = arith.constant 0 : i32
    %c0_i32_1 = arith.constant 0 : i32
    return %arg0, %c0_i32, %c0_i32_0 : i32, i32, i32
  }
  func.func @transform_1(%arg0: i32) -> (i32, i32) {
    %c0_i32 = arith.constant 0 : i32
    %c0_i32_0 = arith.constant 0 : i32
    %c0_i32_1 = arith.constant 0 : i32
    return %c0_i32, %c0_i32_0 : i32, i32
  }
  func.func @transform_2(%arg0: i32) -> (i32, i32, i32) {
    %c0_i32 = arith.constant 0 : i32
    %c0_i32_0 = arith.constant 0 : i32
    %c0_i32_1 = arith.constant 0 : i32
    return %arg0, %c0_i32, %c0_i32_0 : i32, i32, i32
  }
}

module attributes {stable_mosaic.version = 11 : i64} {
  func.func @drs_kernel(%arg0: i32, %arg1: memref<1x4x256xf32, #tpu.memory_space<vmem>>, %arg2: memref<4x4xf32, #tpu.memory_space<vmem>>, %arg3: memref<1x4x256xf32, #tpu.memory_space<vmem>>) attributes {dimension_semantics = [#tpu.dimension_semantics<parallel>], iteration_bounds = array<i64: 2>, scalar_prefetch = 0 : i64, scratch_operands = 0 : i64, tpu.core_type = #tpu.core_type<tc>, window_params = [{transform_indices = @transform_0, window_bounds = array<i64: 1, 4, 256>}, {pipeline_mode = #tpu.pipeline_mode<synchronous>, transform_indices = @transform_1, window_bounds = array<i64: 4, 4>}, {transform_indices = @transform_2, window_bounds = array<i64: 1, 4, 256>}]} {
    %c0 = arith.constant 0 : index
    %c0_0 = arith.constant 0 : index
    %c0_1 = arith.constant 0 : index
    %0 = vector.load %arg1[%c0, %c0_0, %c0_1] : memref<1x4x256xf32, #tpu.memory_space<vmem>>, vector<1x4x256xf32>
    %cst = arith.constant 0.000000e+00 : f32
    %1 = vector.broadcast %cst : f32 to vector<1x4x256xf32>
    %2 = arith.maximumf %0, %1 : vector<1x4x256xf32>
    %cst_2 = arith.constant dense<0xFF800000> : vector<1x4xf32>
    %3 = vector.multi_reduction <maximumf>, %2, %cst_2 [2] : vector<1x4x256xf32> to vector<1x4xf32>
    %cst_3 = arith.constant dense<0.000000e+00> : vector<1x4xf32>
    %4 = vector.multi_reduction <add>, %2, %cst_3 [2] : vector<1x4x256xf32> to vector<1x4xf32>
    %cst_4 = arith.constant 3.906250e-03 : f32
    %5 = vector.broadcast %cst_4 : f32 to vector<1x4xf32>
    %6 = arith.mulf %4, %5 : vector<1x4xf32>
    %c0_5 = arith.constant 0 : index
    %c0_6 = arith.constant 0 : index
    %7 = vector.load %arg2[%c0_5, %c0_6] : memref<4x4xf32, #tpu.memory_space<vmem>>, vector<4x4xf32>
    %cst_7 = arith.constant dense<0.000000e+00> : vector<1x4xf32>
    %8 = tpu.matmul %6, %7, %cst_7 {dimension_numbers = #tpu.dot_dimension_numbers<[1], [0], [0], [1], [0, 0, 1, 1], [], []>} : vector<1x4xf32>, vector<4x4xf32>, vector<1x4xf32> -> vector<1x4xf32>
    %9 = arith.negf %8 : vector<1x4xf32>
    %10 = math.exp %9 : vector<1x4xf32>
    %cst_8 = arith.constant 1.000000e+00 : f32
    %11 = vector.broadcast %cst_8 : f32 to vector<1x4xf32>
    %12 = arith.addf %11, %10 : vector<1x4xf32>
    %13 = arith.divf %11, %12 : vector<1x4xf32>
    %14 = arith.mulf %3, %13 : vector<1x4xf32>
    %15 = vector.shape_cast %14 : vector<1x4xf32> to vector<1x4x1xf32>
    %c0_9 = arith.constant 0 : index
    %c0_10 = arith.constant 0 : index
    %c0_11 = arith.constant 0 : index
    %16 = vector.load %arg1[%c0_9, %c0_10, %c0_11] : memref<1x4x256xf32, #tpu.memory_space<vmem>>, vector<1x4x256xf32>
    %cst_12 = arith.constant 0.000000e+00 : f32
    %17 = vector.broadcast %cst_12 : f32 to vector<1x4x256xf32>
    %18 = arith.maximumf %16, %17 : vector<1x4x256xf32>
    %19 = vector.broadcast %15 : vector<1x4x1xf32> to vector<1x4x256xf32>
    %20 = arith.minimumf %18, %19 : vector<1x4x256xf32>
    %c0_13 = arith.constant 0 : index
    %c0_14 = arith.constant 0 : index
    %c0_15 = arith.constant 0 : index
    %21 = vector.load %arg3[%c0_13, %c0_14, %c0_15] : memref<1x4x256xf32, #tpu.memory_space<vmem>>, vector<1x4x256xf32>
    tpu.vector_store %arg3[%c0_13, %c0_14, %c0_15], %20 {strides = array<i32>} : memref<1x4x256xf32, #tpu.memory_space<vmem>>, vector<1x4x256xf32>,
    return
  }
  func.func @transform_0(%arg0: i32) -> (i32, i32, i32) {
    %c0_i32 = arith.constant 0 : i32
    %c0_i32_0 = arith.constant 0 : i32
    %c0_i32_1 = arith.constant 0 : i32
    return %arg0, %c0_i32, %c0_i32_0 : i32, i32, i32
  }
  func.func @transform_1(%arg0: i32) -> (i32, i32) {
    %c0_i32 = arith.constant 0 : i32
    %c0_i32_0 = arith.constant 0 : i32
    %c0_i32_1 = arith.constant 0 : i32
    return %c0_i32, %c0_i32_0 : i32, i32
  }
  func.func @transform_2(%arg0: i32) -> (i32, i32, i32) {
    %c0_i32 = arith.constant 0 : i32
    %c0_i32_0 = arith.constant 0 : i32
    %c0_i32_1 = arith.constant 0 : i32
    return %arg0, %c0_i32, %c0_i32_0 : i32, i32, i32
  }
}

</mosaic_0001>

<llo_original>
// kernel: tpu_custom_call.1
$region0: #{tpu_custom_call.1}
  #allocation0 [shape = 'u32[]', space=smem, size = 0x4, offset = 0x4, fixed_abs, tag = 'smem constant byte address 0x4 - core index']
  #allocation1 [shape = 'u32[144,128]{1,0:T(1,128)}', space=vmem, size = 0x12000, scoped, tag = 'internal scratch']
  %s0 = inlined_call_operand.hbm [shape: f32[2,4,256], index: 0, kind: input, shape index: {}]
  %s1 = inlined_call_operand.hbm [shape: f32[4,4], index: 1, kind: input, shape index: {}]
  %s2 = inlined_call_operand.hbm [shape: f32[2,4,256], index: 2, kind: output, shape index: {}]
  %s3 = sld [smem:[#allocation0]]
  $region49: #{tpu_custom_call.1} parent=0
    _
  %s5 = ssub.s32 1, %s3
  %s6 = scalar_select 0, %s5, %s3
  $region1: #{tpu_custom_call.1} parent=0
    #allocation2 [shape = 'u8[8192]{0}', space=vmem, size = 0x2000, scoped, tag = 'input window, operand 0']
    #allocation3 [shape = 's32[2]{0}', space=sflag, size = 0x8, scoped, tag = 'scoped memory for tpu_custom_call.1']
    #allocation4 [shape = 's32[2]{0}', space=sflag, size = 0x8, scoped, tag = 'scoped memory for tpu_custom_call.1']
    #allocation5 [shape = 'u8[2048]{0}', space=vmem, size = 0x800, scoped, tag = 'input window, operand 1, single buffered']
    #allocation6 [shape = 's32[1]{0}', space=sflag, size = 0x4, scoped, tag = 'scoped memory for tpu_custom_call.1']
    #allocation7 [shape = 'u8[8192]{0}', space=vmem, size = 0x2000, scoped, tag = 'output window, operand 0']
    %7 = vsyncpa [#allocation3], 0
    %s8 = scalar_lea.sflag [#allocation3], 1
    %9 = vsyncpa %s8, 0
    %10 = vsyncpa [#allocation6], 0
    %11 = vsyncpa [#allocation4], 0
    %s12 = scalar_lea.sflag [#allocation4], 1
    %13 = vsyncpa %s12, 0
    loop: start=0, step=1, limit=4
    $region2: #{tpu_custom_call.1} parent=1 // loop_pre_header
      _
    $region3: #{tpu_custom_call.1} parent=1 // loop_header
      %s15 = sphi 0, %s19
      %p16 = scmp.ge.s32.totalorder %s15, 4
      %s25 = sphi 0, %s27
      %s28 = sphi 0, %s25
      %s29 = sphi 0, %s28
      %s45 = sphi 0, %s29
      %s49 = sphi 0, %s49
      %s51 = sphi 0, %s49
      %s52 = sphi 0, %s51
      %s66 = sphi 0, %s52
      %s72 = sphi 0, %s74
      %s75 = sphi 0, %s72
      %s76 = sphi 0, %s75
      %s92 = sphi 0, %s76
    $region4: #{tpu_custom_call.1} parent=1 // loop_header_branch
      %18 = sbr.rel (%p16) target = $region8
    $region5: #{tpu_custom_call.1} parent=1 // loop_body
      %s20 = ssub.s32 %s15, 1
      %s21 = ssub.s32 %s15, 2
      %s22 = sadd.s32 %s15, 1
      %s23 = ssub.s32 %s15, %s22
      %p24 = scmp.eq.s32.totalorder %s23, 0
      %s26 = sadd.s32 %s25, 1
      %s27 = scalar_select %p24, %s25, %s26
      %p30 = pneg %p24
      %p31 = scmp.eq.s32.totalorder %s15, 1
      %p32 = por %p30, %p31
      %p33 = scmp.ne.s32.totalorder %s25, %s28
      %p34 = scmp.eq.s32.totalorder %s15, 0
      %p35 = por %p33, %p34
      %p36 = scmp.ne.s32.totalorder %s25, %s28
      %p37 = scmp.eq.s32.totalorder %s20, 1
      %p38 = por %p36, %p37
      %p39 = scmp.ne.s32.totalorder %s28, %s29
      %p40 = scmp.eq.s32.totalorder %s20, 0
      %p41 = por %p39, %p40
      %p42 = scmp.ne.s32.totalorder %s28, %s29
      %p43 = scmp.eq.s32.totalorder %s21, 1
      %p44 = por %p42, %p43
      %p46 = scmp.ne.s32.totalorder %s29, %s45
      %p47 = scmp.eq.s32.totalorder %s21, 0
      %p48 = por %p46, %p47
      %s50 = sadd.s32 %s49, 1
      %p53 = scmp.eq.s32.totalorder %s15, 1
      %p54 = scmp.ne.s32.totalorder %s49, %s51
      %p55 = scmp.eq.s32.totalorder %s15, 0
      %p56 = por %p54, %p55
      %p57 = scmp.ne.s32.totalorder %s49, %s51
      %p58 = scmp.eq.s32.totalorder %s20, 1
      %p59 = por %p57, %p58
      %p60 = scmp.ne.s32.totalorder %s51, %s52
      %p61 = scmp.eq.s32.totalorder %s20, 0
      %p62 = por %p60, %p61
      %p63 = scmp.ne.s32.totalorder %s51, %s52
      %p64 = scmp.eq.s32.totalorder %s21, 1
      %p65 = por %p63, %p64
      %p67 = scmp.ne.s32.totalorder %s52, %s66
      %p68 = scmp.eq.s32.totalorder %s21, 0
      %p69 = por %p67, %p68
      %s70 = ssub.s32 %s15, %s22
      %p71 = scmp.eq.s32.totalorder %s70, 0
      %s73 = sadd.s32 %s72, 1
      %s74 = scalar_select %p71, %s72, %s73
      %p77 = pneg %p71
      %p78 = scmp.eq.s32.totalorder %s15, 1
      %p79 = por %p77, %p78
      %p80 = scmp.ne.s32.totalorder %s72, %s75
      %p81 = scmp.eq.s32.totalorder %s15, 0
      %p82 = por %p80, %p81
      %p83 = scmp.ne.s32.totalorder %s72, %s75
      %p84 = scmp.eq.s32.totalorder %s20, 1
      %p85 = por %p83, %p84
      %p86 = scmp.ne.s32.totalorder %s75, %s76
      %p87 = scmp.eq.s32.totalorder %s20, 0
      %p88 = por %p86, %p87
      %p89 = scmp.ne.s32.totalorder %s75, %s76
      %p90 = scmp.eq.s32.totalorder %s21, 1
      %p91 = por %p89, %p90
      %p93 = scmp.ne.s32.totalorder %s76, %s92
      %p94 = scmp.eq.s32.totalorder %s21, 0
      %p95 = por %p93, %p94
      %p96 = scmp.le.s32.totalorder 1, %s15
      %p97 = scmp.lt.s32.totalorder %s15, 3
      %p98 = pnand %p96, %p97
      %p99 = pneg %p98
      // Predicated region
      $region9: #{tpu_custom_call.1} parent=5 // pred_check
        _
      $region10: #{tpu_custom_call.1} parent=5 // pred_check_branch
        %101 = sbr.rel (%p98) target = $region12
      $region11: #{tpu_custom_call.1} parent=5 // pred_region
        %s102 = ssub.s32 %s15, 1
        // Predicated region
        $region13: #{tpu_custom_call.1} parent=11 // pred_check
          %p103 = pneg %p62
        $region14: #{tpu_custom_call.1} parent=11 // pred_check_branch
          %105 = sbr.rel (%p103) target = $region16
        $region15: #{tpu_custom_call.1} parent=11 // pred_region
          %s107 = ssub.s32 64, 64
          %108 = vsyncadd [#allocation6], %s107
          %s110 = sshll.u32 [#allocation5], 4
          %s111 = int_to_ptr.vmem [resolvable:$true] %s110
          %113 = dma.hbm_to_vmem [thread:$0]  %s1, 64, %s111, [#allocation6]
        $region16: #{tpu_custom_call.1} parent=11 // pred_fallthru
          _
      $region12: #{tpu_custom_call.1} parent=5 // pred_fallthru
        _
      %p114 = scmp.lt.s32.totalorder %s15, 2
      // Predicated region
      $region17: #{tpu_custom_call.1} parent=5 // pred_check
        %p115 = pneg %p114
      $region18: #{tpu_custom_call.1} parent=5 // pred_check_branch
        %117 = sbr.rel (%p115) target = $region20
      $region19: #{tpu_custom_call.1} parent=5 // pred_region
        // Predicated region
        $region21: #{tpu_custom_call.1} parent=19 // pred_check
          %p118 = pneg %p35
        $region22: #{tpu_custom_call.1} parent=19 // pred_check_branch
          %120 = sbr.rel (%p118) target = $region24
        $region23: #{tpu_custom_call.1} parent=19 // pred_region
          %s121 = sand.u32 %s25, 1
          %s122 = scalar_lea.sflag [#allocation3], %s121
          %s123 = sand.u32 %s25, 1
          %s124 = smul.addr %s123, 8
          %s125 = scalar_lea.vmem [#allocation2], %s124
          %s127 = ssub.s32 128, 128
          %128 = vsyncadd %s122, %s127
          %s129 = smul.addr %s15, 2
          %s130 = smul.addr %s129, 64
          %s131 = scalar_lea.hbm %s0, %s130
          %s133 = sshll.u32 %s125, 4
          %s134 = int_to_ptr.vmem [resolvable:$true] %s133
          %136 = dma.hbm_to_vmem [thread:$0]  %s131, 128, %s134, %s122
        $region24: #{tpu_custom_call.1} parent=19 // pred_fallthru
          _
      $region20: #{tpu_custom_call.1} parent=5 // pred_fallthru
        _
      %p137 = scmp.le.s32.totalorder 1, %s15
      %p138 = scmp.lt.s32.totalorder %s15, 3
      %p139 = pnand %p137, %p138
      %p140 = pneg %p139
      // Predicated region
      $region25: #{tpu_custom_call.1} parent=5 // pred_check
        _
      $region26: #{tpu_custom_call.1} parent=5 // pred_check_branch
        %142 = sbr.rel (%p139) target = $region28
      $region27: #{tpu_custom_call.1} parent=5 // pred_region
        %s143 = ssub.s32 %s15, 1
        %s144 = sand.u32 %s28, 1
        %s145 = scalar_lea.sflag [#allocation3], %s144
        %s146 = sand.u32 %s28, 1
        %s147 = smul.addr %s146, 8
        %s148 = scalar_lea.vmem [#allocation2], %s147
        // Predicated region
        $region29: #{tpu_custom_call.1} parent=27 // pred_check
          %p149 = pneg %p41
        $region30: #{tpu_custom_call.1} parent=27 // pred_check_branch
          %151 = sbr.rel (%p149) target = $region32
        $region31: #{tpu_custom_call.1} parent=27 // pred_region
          %152 = dma.done %s145, 128
        $region32: #{tpu_custom_call.1} parent=27 // pred_fallthru
          _
        // Predicated region
        $region33: #{tpu_custom_call.1} parent=27 // pred_check
          %p153 = pneg %p62
        $region34: #{tpu_custom_call.1} parent=27 // pred_check_branch
          %155 = sbr.rel (%p153) target = $region36
        $region35: #{tpu_custom_call.1} parent=27 // pred_region
          %156 = dma.done [#allocation6], 64
        $region36: #{tpu_custom_call.1} parent=27 // pred_fallthru
          _
        %s157 = sand.u32 %s28, 1
        %s158 = scalar_lea.sflag [#allocation3], %s157
        %s159 = sand.u32 %s28, 1
        %s160 = smul.addr %s159, 8
        %s161 = scalar_lea.vmem [#allocation2], %s160
        %p162 = pneg %p41
        %p163 = pneg %p38
        %p164 = pneg %p62
        %p165 = pneg %p59
        %p166 = pneg %p88
        %p167 = pneg %p85
        %s168 = sand.u32 %s75, 1
        %s169 = scalar_lea.sflag [#allocation4], %s168
        %s170 = sand.u32 %s75, 1
        %s171 = smul.addr %s170, 8
        %s172 = scalar_lea.vmem [#allocation7], %s171
        %v173 = vld [vmem:[%s148] sm:$0xff]
        %v174 = vmax.f32 %v173, 0.0
        %v176 = vcombine.high %v174, %v174
        %vm178 = vcmask 1043456
        %v179 = vsel %vm178, %v174, -inf
        %v180 = vsel %vm178, %v176, -inf
        %v181 = vmax.f32 %v179, %v180
        %182 = vmax.xlane.f32.xlu0 %v181
        %v183 = vpop.xlane.xlu0 %182
        %v184 = vsel %vm178, %v174, 0.0
        %v185 = vsel %vm178, %v176, 0.0
        %v186 = vadd.f32 %v184, %v185
        %187 = vadd.xlane.f32.xlu0 %v186
        %v188 = vpop.xlane.xlu0 %187
        %v189 = vmul.f32 %v188, 0.00390625
        %v190 = vld [vmem:[#allocation5] sm:$0xf]
        %v192 = vlaneseq
        %v193 = vand.u32 %v192, 127
        %v194 = vlaneseq
        %v195 = vshrl.u32 %v194, 7
        %v196 = vsub.s32 %v193, %v195
        %v197 = vrot.slane %v189, %v196
        %vm198 = vcmask 31744
        %v199 = vsel %vm198, %v197, 0
        %v202 = vsel %vm178, %v190, 0
        %204 = vmatprep.subr.mxu0 0.0
        %205 = vmatpush1.msra.mxu0 %v202
        %206 = vmatprep.subr.mxu0 0.0
        %207 = vmatpush1.msra.mxu0 0.0
        %208 = vmatprep.subr.mxu0 0.0
        %209 = vmatpush1.msra.mxu0 0.0
        %210 = vmatprep.subr.mxu0 0.0
        %211 = vmatpush1.msra.mxu0 0.0
        %212 = vmatprep.subr.mxu0 0.0
        %213 = vmatpush1.msra.mxu0 0.0
        %214 = vmatprep.subr.mxu0 0.0
        %215 = vmatpush1.msra.mxu0 0.0
        %216 = vmatprep.subr.mxu0 0.0
        %217 = vmatpush1.msra.mxu0 0.0
        %218 = vmatprep.subr.mxu0 0.0
        %219 = vmatpush1.msra.mxu0 0.0
        %220 = vmatprep.subr.mxu0 0.0
        %221 = vmatpush1.msra.mxu0 0.0
        %222 = vmatprep.subr.mxu0 0.0
        %223 = vmatpush1.msra.mxu0 0.0
        %224 = vmatprep.subr.mxu0 0.0
        %225 = vmatpush1.msra.mxu0 0.0
        %226 = vmatprep.subr.mxu0 0.0
        %227 = vmatpush1.msra.mxu0 0.0
        %228 = vmatprep.subr.mxu0 0.0
        %229 = vmatpush1.msra.mxu0 0.0
        %230 = vmatprep.subr.mxu0 0.0
        %231 = vmatpush1.msra.mxu0 0.0
        %232 = vmatprep.subr.mxu0 0.0
        %233 = vmatpush1.msra.mxu0 0.0
        %234 = vmatprep.subr.mxu0 0.0
        %235 = vmatpush1.msra.mxu0 0.0
        %236 = vmatprep.subr.mxu0 0.0
        %237 = vmatpush1.msra.mxu0 0.0
        %238 = vmatprep.subr.mxu0 0.0
        %239 = vmatpush1.msra.mxu0 0.0
        %240 = vmatprep.subr.mxu0 0.0
        %241 = vmatpush1.msra.mxu0 0.0
        %242 = vmatprep.subr.mxu0 0.0
        %243 = vmatpush1.msra.mxu0 0.0
        %244 = vmatprep.subr.mxu0 0.0
        %245 = vmatpush1.msra.mxu0 0.0
        %246 = vmatprep.subr.mxu0 0.0
        %247 = vmatpush1.msra.mxu0 0.0
        %248 = vmatprep.subr.mxu0 0.0
        %249 = vmatpush1.msra.mxu0 0.0
        %250 = vmatprep.subr.mxu0 0.0
        %251 = vmatpush1.msra.mxu0 0.0
        %252 = vmatprep.subr.mxu0 0.0
        %253 = vmatpush1.msra.mxu0 0.0
        %254 = vmatprep.subr.mxu0 0.0
        %255 = vmatpush1.msra.mxu0 0.0
        %256 = vmatprep.subr.mxu0 0.0
        %257 = vmatpush1.msra.mxu0 0.0
        %258 = vmatprep.subr.mxu0 0.0
        %259 = vmatpush1.msra.mxu0 0.0
        %260 = vmatprep.subr.mxu0 0.0
        %261 = vmatpush1.msra.mxu0 0.0
        %262 = vmatprep.subr.mxu0 0.0
        %263 = vmatpush1.msra.mxu0 0.0
        %264 = vmatprep.subr.mxu0 0.0
        %265 = vmatpush1.msra.mxu0 0.0
        %266 = vmatprep.subr.mxu0 0.0
        %267 = vmatpush1.msra.mxu0 0.0
        %268 = vmatprep.mubr.f32.mxu0 0.0
        %269 = vmatmul.mubr.f32.gmra.mrb[0].mxu0 %v199
        %v270 = vpop.f32.mrb[0].mxu0
        %v271 = vadd.f32 0.0, %v270
        %v272 = vpop.f32.mrb[0].mxu0
        %273 = vdwg.mxu0
        %v274 = vxor.u32 %v271, 2147483648
        %v275 = vmul.f32 %v274, 1.442695
        %v276 = vpow.pop %v275
        %v277 = vadd.f32 %v276, 1.0
        %v278 = vrcp.pop %v277
        %v279 = vmul.f32 1.0, %v278
        %v281 = vlaneseq
        %v282 = vshrl.u32 %v281, 7
        %v283 = vsub.s32 0, %v282
        %v284 = vrot.slane %v279, %v283
        %286 = vbcast.lane.b32.xlu0 %v284, 256
        %v287 = vpop.permute.xlu0 %286
        %v289 = vmul.f32 %v183, %v287
        %291 = vset.pattern.permute.xlu0 0
        %292 = vperm.xlu0 %291, %v289
        %v293 = vpop.permute.xlu0 %292
        %v295 = vunpack.c.l.s4 839922192
        %v296 = vunpack.c.0.s8 %v295
        %v297 = vlaneseq
        %v298 = vshrl.u32 %v297, 7
        %v299 = vsub.s32 %v296, %v298
        %v300 = vrot.slane %v293, %v299
        %v302 = vmin.f32 %v174, %v300
        %303 = vst [vmem:[%s172] sm:$0xff] %v302
        %s304 = sand.u32 %s75, 1
        %s305 = scalar_lea.sflag [#allocation4], %s304
        %s306 = sand.u32 %s75, 1
        %s307 = smul.addr %s306, 8
        %s308 = scalar_lea.vmem [#allocation7], %s307
        // Predicated region
        $region37: #{tpu_custom_call.1} parent=27 // pred_check
          %p309 = pneg %p85
        $region38: #{tpu_custom_call.1} parent=27 // pred_check_branch
          %311 = sbr.rel (%p309) target = $region40
        $region39: #{tpu_custom_call.1} parent=27 // pred_region
          %s313 = ssub.s32 128, 128
          %314 = vsyncadd %s305, %s313
          %s315 = smul.addr %s20, 2
          %s316 = smul.addr %s315, 64
          %s317 = scalar_lea.hbm %s2, %s316
          %s319 = sshll.u32 %s308, 4
          %s320 = int_to_ptr.vmem [resolvable:$true] %s319
          %322 = dma.vmem_to_hbm [thread:$0]  %s320, 128, %s317, %s305
        $region40: #{tpu_custom_call.1} parent=27 // pred_fallthru
          _
      $region28: #{tpu_custom_call.1} parent=5 // pred_fallthru
        _
      %p323 = scmp.le.s32.totalorder 2, %s15
      // Predicated region
      $region41: #{tpu_custom_call.1} parent=5 // pred_check
        %p324 = pneg %p323
      $region42: #{tpu_custom_call.1} parent=5 // pred_check_branch
        %326 = sbr.rel (%p324) target = $region44
      $region43: #{tpu_custom_call.1} parent=5 // pred_region
        %s327 = ssub.s32 %s15, 2
        // Predicated region
        $region45: #{tpu_custom_call.1} parent=43 // pred_check
          %p328 = pneg %p91
        $region46: #{tpu_custom_call.1} parent=43 // pred_check_branch
          %330 = sbr.rel (%p328) target = $region48
        $region47: #{tpu_custom_call.1} parent=43 // pred_region
          %s331 = sand.u32 %s76, 1
          %s332 = scalar_lea.sflag [#allocation4], %s331
          %s333 = sand.u32 %s76, 1
          %s334 = smul.addr %s333, 8
          %s335 = scalar_lea.vmem [#allocation7], %s334
          %336 = dma.done %s332, 128
        $region48: #{tpu_custom_call.1} parent=43 // pred_fallthru
          _
      $region44: #{tpu_custom_call.1} parent=5 // pred_fallthru
        _
    $region6: #{tpu_custom_call.1} parent=1 // loop_footer
      %s19 = sadd.s32 1, %s15
    $region7: #{tpu_custom_call.1} parent=1 // loop_footer_branch
      %14 = sbr.rel target = $region3
    $region8: #{tpu_custom_call.1} parent=1 // loop_exit
      _
    %337 = vsyncpa [#allocation3], 1
    %s338 = scalar_lea.sflag [#allocation3], 1
    %339 = vsyncpa %s338, 1
    %340 = vsyncpa [#allocation6], 1
    %341 = vsyncpa [#allocation4], 1
    %s342 = scalar_lea.sflag [#allocation4], 1
    %343 = vsyncpa %s342, 1

// kernel: tpu_custom_call.1
$region0: #{tpu_custom_call.1}
  #allocation0 [shape = 'u32[]', space=smem, size = 0x4, offset = 0x4, fixed_abs, tag = 'smem constant byte address 0x4 - core index']
  #allocation1 [shape = 'u32[144,128]{1,0:T(1,128)}', space=vmem, size = 0x12000, scoped, tag = 'internal scratch']
  %s0 = inlined_call_operand.hbm [shape: f32[2,4,256], index: 0, kind: input, shape index: {}]
  %s1 = inlined_call_operand.hbm [shape: f32[4,4], index: 1, kind: input, shape index: {}]
  %s2 = inlined_call_operand.hbm [shape: f32[2,4,256], index: 2, kind: output, shape index: {}]
  %s3 = sld [smem:[#allocation0]]
  $region49: #{tpu_custom_call.1} parent=0
    _
  %s5 = ssub.s32 1, %s3
  %s6 = scalar_select 0, %s5, %s3
  $region1: #{tpu_custom_call.1} parent=0
    #allocation2 [shape = 'u8[8192]{0}', space=vmem, size = 0x2000, scoped, tag = 'input window, operand 0']
    #allocation3 [shape = 's32[2]{0}', space=sflag, size = 0x8, scoped, tag = 'scoped memory for tpu_custom_call.1']
    #allocation4 [shape = 's32[2]{0}', space=sflag, size = 0x8, scoped, tag = 'scoped memory for tpu_custom_call.1']
    #allocation5 [shape = 'u8[2048]{0}', space=vmem, size = 0x800, scoped, tag = 'input window, operand 1, single buffered']
    #allocation6 [shape = 's32[1]{0}', space=sflag, size = 0x4, scoped, tag = 'scoped memory for tpu_custom_call.1']
    #allocation7 [shape = 'u8[8192]{0}', space=vmem, size = 0x2000, scoped, tag = 'output window, operand 0']
    %7 = vsyncpa [#allocation3], 0
    %s8 = scalar_lea.sflag [#allocation3], 1
    %9 = vsyncpa %s8, 0
    %10 = vsyncpa [#allocation6], 0
    %11 = vsyncpa [#allocation4], 0
    %s12 = scalar_lea.sflag [#allocation4], 1
    %13 = vsyncpa %s12, 0
    loop: start=0, step=1, limit=4
    $region2: #{tpu_custom_call.1} parent=1 // loop_pre_header
      _
    $region3: #{tpu_custom_call.1} parent=1 // loop_header
      %s15 = sphi 0, %s19
      %p16 = scmp.ge.s32.totalorder %s15, 4
      %s25 = sphi 0, %s27
      %s28 = sphi 0, %s25
      %s29 = sphi 0, %s28
      %s45 = sphi 0, %s29
      %s49 = sphi 0, %s49
      %s51 = sphi 0, %s49
      %s52 = sphi 0, %s51
      %s66 = sphi 0, %s52
      %s72 = sphi 0, %s74
      %s75 = sphi 0, %s72
      %s76 = sphi 0, %s75
      %s92 = sphi 0, %s76
    $region4: #{tpu_custom_call.1} parent=1 // loop_header_branch
      %18 = sbr.rel (%p16) target = $region8
    $region5: #{tpu_custom_call.1} parent=1 // loop_body
      %s20 = ssub.s32 %s15, 1
      %s21 = ssub.s32 %s15, 2
      %s22 = sadd.s32 %s15, 1
      %s23 = ssub.s32 %s15, %s22
      %p24 = scmp.eq.s32.totalorder %s23, 0
      %s26 = sadd.s32 %s25, 1
      %s27 = scalar_select %p24, %s25, %s26
      %p30 = pneg %p24
      %p31 = scmp.eq.s32.totalorder %s15, 1
      %p32 = por %p30, %p31
      %p33 = scmp.ne.s32.totalorder %s25, %s28
      %p34 = scmp.eq.s32.totalorder %s15, 0
      %p35 = por %p33, %p34
      %p36 = scmp.ne.s32.totalorder %s25, %s28
      %p37 = scmp.eq.s32.totalorder %s20, 1
      %p38 = por %p36, %p37
      %p39 = scmp.ne.s32.totalorder %s28, %s29
      %p40 = scmp.eq.s32.totalorder %s20, 0
      %p41 = por %p39, %p40
      %p42 = scmp.ne.s32.totalorder %s28, %s29
      %p43 = scmp.eq.s32.totalorder %s21, 1
      %p44 = por %p42, %p43
      %p46 = scmp.ne.s32.totalorder %s29, %s45
      %p47 = scmp.eq.s32.totalorder %s21, 0
      %p48 = por %p46, %p47
      %s50 = sadd.s32 %s49, 1
      %p53 = scmp.eq.s32.totalorder %s15, 1
      %p54 = scmp.ne.s32.totalorder %s49, %s51
      %p55 = scmp.eq.s32.totalorder %s15, 0
      %p56 = por %p54, %p55
      %p57 = scmp.ne.s32.totalorder %s49, %s51
      %p58 = scmp.eq.s32.totalorder %s20, 1
      %p59 = por %p57, %p58
      %p60 = scmp.ne.s32.totalorder %s51, %s52
      %p61 = scmp.eq.s32.totalorder %s20, 0
      %p62 = por %p60, %p61
      %p63 = scmp.ne.s32.totalorder %s51, %s52
      %p64 = scmp.eq.s32.totalorder %s21, 1
      %p65 = por %p63, %p64
      %p67 = scmp.ne.s32.totalorder %s52, %s66
      %p68 = scmp.eq.s32.totalorder %s21, 0
      %p69 = por %p67, %p68
      %s70 = ssub.s32 %s15, %s22
      %p71 = scmp.eq.s32.totalorder %s70, 0
      %s73 = sadd.s32 %s72, 1
      %s74 = scalar_select %p71, %s72, %s73
      %p77 = pneg %p71
      %p78 = scmp.eq.s32.totalorder %s15, 1
      %p79 = por %p77, %p78
      %p80 = scmp.ne.s32.totalorder %s72, %s75
      %p81 = scmp.eq.s32.totalorder %s15, 0
      %p82 = por %p80, %p81
      %p83 = scmp.ne.s32.totalorder %s72, %s75
      %p84 = scmp.eq.s32.totalorder %s20, 1
      %p85 = por %p83, %p84
      %p86 = scmp.ne.s32.totalorder %s75, %s76
      %p87 = scmp.eq.s32.totalorder %s20, 0
      %p88 = por %p86, %p87
      %p89 = scmp.ne.s32.totalorder %s75, %s76
      %p90 = scmp.eq.s32.totalorder %s21, 1
      %p91 = por %p89, %p90
      %p93 = scmp.ne.s32.totalorder %s76, %s92
      %p94 = scmp.eq.s32.totalorder %s21, 0
      %p95 = por %p93, %p94
      %p96 = scmp.le.s32.totalorder 1, %s15
      %p97 = scmp.lt.s32.totalorder %s15, 3
      %p98 = pnand %p96, %p97
      %p99 = pneg %p98
      // Predicated region
      $region9: #{tpu_custom_call.1} parent=5 // pred_check
        _
      $region10: #{tpu_custom_call.1} parent=5 // pred_check_branch
        %101 = sbr.rel (%p98) target = $region12
      $region11: #{tpu_custom_call.1} parent=5 // pred_region
        %s102 = ssub.s32 %s15, 1
        // Predicated region
        $region13: #{tpu_custom_call.1} parent=11 // pred_check
          %p103 = pneg %p62
        $region14: #{tpu_custom_call.1} parent=11 // pred_check_branch
          %105 = sbr.rel (%p103) target = $region16
        $region15: #{tpu_custom_call.1} parent=11 // pred_region
          %s107 = ssub.s32 64, 64
          %108 = vsyncadd [#allocation6], %s107
          %s110 = sshll.u32 [#allocation5], 4
          %s111 = int_to_ptr.vmem [resolvable:$true] %s110
          %113 = dma.hbm_to_vmem [thread:$0]  %s1, 64, %s111, [#allocation6]
        $region16: #{tpu_custom_call.1} parent=11 // pred_fallthru
          _
      $region12: #{tpu_custom_call.1} parent=5 // pred_fallthru
        _
      %p114 = scmp.lt.s32.totalorder %s15, 2
      // Predicated region
      $region17: #{tpu_custom_call.1} parent=5 // pred_check
        %p115 = pneg %p114
      $region18: #{tpu_custom_call.1} parent=5 // pred_check_branch
        %117 = sbr.rel (%p115) target = $region20
      $region19: #{tpu_custom_call.1} parent=5 // pred_region
        // Predicated region
        $region21: #{tpu_custom_call.1} parent=19 // pred_check
          %p118 = pneg %p35
        $region22: #{tpu_custom_call.1} parent=19 // pred_check_branch
          %120 = sbr.rel (%p118) target = $region24
        $region23: #{tpu_custom_call.1} parent=19 // pred_region
          %s121 = sand.u32 %s25, 1
          %s122 = scalar_lea.sflag [#allocation3], %s121
          %s123 = sand.u32 %s25, 1
          %s124 = smul.addr %s123, 8
          %s125 = scalar_lea.vmem [#allocation2], %s124
          %s127 = ssub.s32 128, 128
          %128 = vsyncadd %s122, %s127
          %s129 = smul.addr %s15, 2
          %s130 = smul.addr %s129, 64
          %s131 = scalar_lea.hbm %s0, %s130
          %s133 = sshll.u32 %s125, 4
          %s134 = int_to_ptr.vmem [resolvable:$true] %s133
          %136 = dma.hbm_to_vmem [thread:$0]  %s131, 128, %s134, %s122
        $region24: #{tpu_custom_call.1} parent=19 // pred_fallthru
          _
      $region20: #{tpu_custom_call.1} parent=5 // pred_fallthru
        _
      %p137 = scmp.le.s32.totalorder 1, %s15
      %p138 = scmp.lt.s32.totalorder %s15, 3
      %p139 = pnand %p137, %p138
      %p140 = pneg %p139
      // Predicated region
      $region25: #{tpu_custom_call.1} parent=5 // pred_check
        _
      $region26: #{tpu_custom_call.1} parent=5 // pred_check_branch
        %142 = sbr.rel (%p139) target = $region28
      $region27: #{tpu_custom_call.1} parent=5 // pred_region
        %s143 = ssub.s32 %s15, 1
        %s144 = sand.u32 %s28, 1
        %s145 = scalar_lea.sflag [#allocation3], %s144
        %s146 = sand.u32 %s28, 1
        %s147 = smul.addr %s146, 8
        %s148 = scalar_lea.vmem [#allocation2], %s147
        // Predicated region
        $region29: #{tpu_custom_call.1} parent=27 // pred_check
          %p149 = pneg %p41
        $region30: #{tpu_custom_call.1} parent=27 // pred_check_branch
          %151 = sbr.rel (%p149) target = $region32
        $region31: #{tpu_custom_call.1} parent=27 // pred_region
          %152 = dma.done %s145, 128
        $region32: #{tpu_custom_call.1} parent=27 // pred_fallthru
          _
        // Predicated region
        $region33: #{tpu_custom_call.1} parent=27 // pred_check
          %p153 = pneg %p62
        $region34: #{tpu_custom_call.1} parent=27 // pred_check_branch
          %155 = sbr.rel (%p153) target = $region36
        $region35: #{tpu_custom_call.1} parent=27 // pred_region
          %156 = dma.done [#allocation6], 64
        $region36: #{tpu_custom_call.1} parent=27 // pred_fallthru
          _
        %s157 = sand.u32 %s28, 1
        %s158 = scalar_lea.sflag [#allocation3], %s157
        %s159 = sand.u32 %s28, 1
        %s160 = smul.addr %s159, 8
        %s161 = scalar_lea.vmem [#allocation2], %s160
        %p162 = pneg %p41
        %p163 = pneg %p38
        %p164 = pneg %p62
        %p165 = pneg %p59
        %p166 = pneg %p88
        %p167 = pneg %p85
        %s168 = sand.u32 %s75, 1
        %s169 = scalar_lea.sflag [#allocation4], %s168
        %s170 = sand.u32 %s75, 1
        %s171 = smul.addr %s170, 8
        %s172 = scalar_lea.vmem [#allocation7], %s171
        %v173 = vld [vmem:[%s148] sm:$0xff]
        %v174 = vmax.f32 %v173, 0.0
        %v176 = vcombine.high %v174, %v174
        %vm178 = vcmask 1043456
        %v179 = vsel %vm178, %v174, -inf
        %v180 = vsel %vm178, %v176, -inf
        %v181 = vmax.f32 %v179, %v180
        %182 = vmax.xlane.f32.xlu0 %v181
        %v183 = vpop.xlane.xlu0 %182
        %v184 = vsel %vm178, %v174, 0.0
        %v185 = vsel %vm178, %v176, 0.0
        %v186 = vadd.f32 %v184, %v185
        %187 = vadd.xlane.f32.xlu0 %v186
        %v188 = vpop.xlane.xlu0 %187
        %v189 = vmul.f32 %v188, 0.00390625
        %v190 = vld [vmem:[#allocation5] sm:$0xf]
        %v192 = vlaneseq
        %v193 = vand.u32 %v192, 127
        %v194 = vlaneseq
        %v195 = vshrl.u32 %v194, 7
        %v196 = vsub.s32 %v193, %v195
        %v197 = vrot.slane %v189, %v196
        %vm198 = vcmask 31744
        %v199 = vsel %vm198, %v197, 0
        %v202 = vsel %vm178, %v190, 0
        %204 = vmatprep.subr.mxu0 0.0
        %205 = vmatpush1.msra.mxu0 %v202
        %206 = vmatprep.subr.mxu0 0.0
        %207 = vmatpush1.msra.mxu0 0.0
        %208 = vmatprep.subr.mxu0 0.0
        %209 = vmatpush1.msra.mxu0 0.0
        %210 = vmatprep.subr.mxu0 0.0
        %211 = vmatpush1.msra.mxu0 0.0
        %212 = vmatprep.subr.mxu0 0.0
        %213 = vmatpush1.msra.mxu0 0.0
        %214 = vmatprep.subr.mxu0 0.0
        %215 = vmatpush1.msra.mxu0 0.0
        %216 = vmatprep.subr.mxu0 0.0
        %217 = vmatpush1.msra.mxu0 0.0
        %218 = vmatprep.subr.mxu0 0.0
        %219 = vmatpush1.msra.mxu0 0.0
        %220 = vmatprep.subr.mxu0 0.0
        %221 = vmatpush1.msra.mxu0 0.0
        %222 = vmatprep.subr.mxu0 0.0
        %223 = vmatpush1.msra.mxu0 0.0
        %224 = vmatprep.subr.mxu0 0.0
        %225 = vmatpush1.msra.mxu0 0.0
        %226 = vmatprep.subr.mxu0 0.0
        %227 = vmatpush1.msra.mxu0 0.0
        %228 = vmatprep.subr.mxu0 0.0
        %229 = vmatpush1.msra.mxu0 0.0
        %230 = vmatprep.subr.mxu0 0.0
        %231 = vmatpush1.msra.mxu0 0.0
        %232 = vmatprep.subr.mxu0 0.0
        %233 = vmatpush1.msra.mxu0 0.0
        %234 = vmatprep.subr.mxu0 0.0
        %235 = vmatpush1.msra.mxu0 0.0
        %236 = vmatprep.subr.mxu0 0.0
        %237 = vmatpush1.msra.mxu0 0.0
        %238 = vmatprep.subr.mxu0 0.0
        %239 = vmatpush1.msra.mxu0 0.0
        %240 = vmatprep.subr.mxu0 0.0
        %241 = vmatpush1.msra.mxu0 0.0
        %242 = vmatprep.subr.mxu0 0.0
        %243 = vmatpush1.msra.mxu0 0.0
        %244 = vmatprep.subr.mxu0 0.0
        %245 = vmatpush1.msra.mxu0 0.0
        %246 = vmatprep.subr.mxu0 0.0
        %247 = vmatpush1.msra.mxu0 0.0
        %248 = vmatprep.subr.mxu0 0.0
        %249 = vmatpush1.msra.mxu0 0.0
        %250 = vmatprep.subr.mxu0 0.0
        %251 = vmatpush1.msra.mxu0 0.0
        %252 = vmatprep.subr.mxu0 0.0
        %253 = vmatpush1.msra.mxu0 0.0
        %254 = vmatprep.subr.mxu0 0.0
        %255 = vmatpush1.msra.mxu0 0.0
        %256 = vmatprep.subr.mxu0 0.0
        %257 = vmatpush1.msra.mxu0 0.0
        %258 = vmatprep.subr.mxu0 0.0
        %259 = vmatpush1.msra.mxu0 0.0
        %260 = vmatprep.subr.mxu0 0.0
        %261 = vmatpush1.msra.mxu0 0.0
        %262 = vmatprep.subr.mxu0 0.0
        %263 = vmatpush1.msra.mxu0 0.0
        %264 = vmatprep.subr.mxu0 0.0
        %265 = vmatpush1.msra.mxu0 0.0
        %266 = vmatprep.subr.mxu0 0.0
        %267 = vmatpush1.msra.mxu0 0.0
        %268 = vmatprep.mubr.f32.mxu0 0.0
        %269 = vmatmul.mubr.f32.gmra.mrb[0].mxu0 %v199
        %v270 = vpop.f32.mrb[0].mxu0
        %v271 = vadd.f32 0.0, %v270
        %v272 = vpop.f32.mrb[0].mxu0
        %273 = vdwg.mxu0
        %v274 = vxor.u32 %v271, 2147483648
        %v275 = vmul.f32 %v274, 1.442695
        %v276 = vpow.pop %v275
        %v277 = vadd.f32 %v276, 1.0
        %v278 = vrcp.pop %v277
        %v279 = vmul.f32 1.0, %v278
        %v281 = vlaneseq
        %v282 = vshrl.u32 %v281, 7
        %v283 = vsub.s32 0, %v282
        %v284 = vrot.slane %v279, %v283
        %286 = vbcast.lane.b32.xlu0 %v284, 256
        %v287 = vpop.permute.xlu0 %286
        %v289 = vmul.f32 %v183, %v287
        %291 = vset.pattern.permute.xlu0 0
        %292 = vperm.xlu0 %291, %v289
        %v293 = vpop.permute.xlu0 %292
        %v295 = vunpack.c.l.s4 839922192
        %v296 = vunpack.c.0.s8 %v295
        %v297 = vlaneseq
        %v298 = vshrl.u32 %v297, 7
        %v299 = vsub.s32 %v296, %v298
        %v300 = vrot.slane %v293, %v299
        %v302 = vmin.f32 %v174, %v300
        %303 = vst [vmem:[%s172] sm:$0xff] %v302
        %s304 = sand.u32 %s75, 1
        %s305 = scalar_lea.sflag [#allocation4], %s304
        %s306 = sand.u32 %s75, 1
        %s307 = smul.addr %s306, 8
        %s308 = scalar_lea.vmem [#allocation7], %s307
        // Predicated region
        $region37: #{tpu_custom_call.1} parent=27 // pred_check
          %p309 = pneg %p85
        $region38: #{tpu_custom_call.1} parent=27 // pred_check_branch
          %311 = sbr.rel (%p309) target = $region40
        $region39: #{tpu_custom_call.1} parent=27 // pred_region
          %s313 = ssub.s32 128, 128
          %314 = vsyncadd %s305, %s313
          %s315 = smul.addr %s20, 2
          %s316 = smul.addr %s315, 64
          %s317 = scalar_lea.hbm %s2, %s316
          %s319 = sshll.u32 %s308, 4
          %s320 = int_to_ptr.vmem [resolvable:$true] %s319
          %322 = dma.vmem_to_hbm [thread:$0]  %s320, 128, %s317, %s305
        $region40: #{tpu_custom_call.1} parent=27 // pred_fallthru
          _
      $region28: #{tpu_custom_call.1} parent=5 // pred_fallthru
        _
      %p323 = scmp.le.s32.totalorder 2, %s15
      // Predicated region
      $region41: #{tpu_custom_call.1} parent=5 // pred_check
        %p324 = pneg %p323
      $region42: #{tpu_custom_call.1} parent=5 // pred_check_branch
        %326 = sbr.rel (%p324) target = $region44
      $region43: #{tpu_custom_call.1} parent=5 // pred_region
        %s327 = ssub.s32 %s15, 2
        // Predicated region
        $region45: #{tpu_custom_call.1} parent=43 // pred_check
          %p328 = pneg %p91
        $region46: #{tpu_custom_call.1} parent=43 // pred_check_branch
          %330 = sbr.rel (%p328) target = $region48
        $region47: #{tpu_custom_call.1} parent=43 // pred_region
          %s331 = sand.u32 %s76, 1
          %s332 = scalar_lea.sflag [#allocation4], %s331
          %s333 = sand.u32 %s76, 1
          %s334 = smul.addr %s333, 8
          %s335 = scalar_lea.vmem [#allocation7], %s334
          %336 = dma.done %s332, 128
        $region48: #{tpu_custom_call.1} parent=43 // pred_fallthru
          _
      $region44: #{tpu_custom_call.1} parent=5 // pred_fallthru
        _
    $region6: #{tpu_custom_call.1} parent=1 // loop_footer
      %s19 = sadd.s32 1, %s15
    $region7: #{tpu_custom_call.1} parent=1 // loop_footer_branch
      %14 = sbr.rel target = $region3
    $region8: #{tpu_custom_call.1} parent=1 // loop_exit
      _
    %337 = vsyncpa [#allocation3], 1
    %s338 = scalar_lea.sflag [#allocation3], 1
    %339 = vsyncpa %s338, 1
    %340 = vsyncpa [#allocation6], 1
    %341 = vsyncpa [#allocation4], 1
    %s342 = scalar_lea.sflag [#allocation4], 1
    %343 = vsyncpa %s342, 1

</llo_original>
